<compile_context>
chip_gen: v7x
topology: tpu7x:2x2x1
jax: 0.10.0
libtpu: 0.0.40
codegen_flags: <defaults>
</compile_context>

<pallas_src>
import functools

import jax
import jax.numpy as jnp
from jax.experimental import pallas as pl
from jax.experimental.pallas import tpu as pltpu


def _round_up(n, m):
    return ((n + m - 1) // m) * m


def mlp_kernel(x_ref, w1_ref, b1_ref, w2_ref, b2_ref, w3_ref, b3_ref, o_ref):
    compute_dtype = x_ref.dtype
    x = x_ref[...]                                                     # [TB, D_in_p]
    # fc1 + relu (MXU matmul, f32 accumulate; bias/relu on the VPU).
    h1 = jnp.dot(x, w1_ref[...], preferred_element_type=jnp.float32) + b1_ref[...]
    h1 = jnp.maximum(h1, 0.0).astype(compute_dtype)                    # [TB, 128]
    # fc2 + relu
    h2 = jnp.dot(h1, w2_ref[...], preferred_element_type=jnp.float32) + b2_ref[...]
    h2 = jnp.maximum(h2, 0.0).astype(compute_dtype)                    # [TB, 64]
    # fc3 (no activation), lane-dense padded output tile.
    h3 = jnp.dot(h2, w3_ref[...], preferred_element_type=jnp.float32) + b3_ref[...]
    o_ref[...] = h3.astype(o_ref.dtype)                                # [TB, out_p]


@functools.partial(jax.jit, static_argnames=("block_b", "compute_dtype"))
def action_classifier_forward(x, params, *, block_b=512, compute_dtype=jnp.float32):
    """Forward pass of ActionClassifier. x: [B, input_size] -> [B, output_size]."""
    w1, b1, w2, b2, w3, b3 = params
    B, d_in = x.shape
    h1_dim = w1.shape[1]   # 128
    h2_dim = w2.shape[1]   # 64
    out_size = w3.shape[1]

    # Lane-dense padding of the ragged feature dims (input / output) to 128.
    d_in_p = _round_up(d_in, 128)
    out_p = _round_up(out_size, 128)

    # Batch tile: multiple of the native sublane packing (8 for f32, 16 for bf16),
    # capped at block_b (512 keeps double-buffered VMEM << 32 MiB on v7x).
    sublane = 8 * 4 // jnp.dtype(compute_dtype).itemsize
    tb = min(block_b, _round_up(B, sublane))
    b_p = _round_up(B, tb)

    # Wrapper-side zero-padding + dtype casts (biases stay f32; accum is f32).
    x_p = jnp.pad(x, ((0, b_p - B), (0, d_in_p - d_in))).astype(compute_dtype)
    w1_p = jnp.pad(w1, ((0, d_in_p - d_in), (0, 0))).astype(compute_dtype)
    w2_c = w2.astype(compute_dtype)
    w3_p = jnp.pad(w3, ((0, 0), (0, out_p - out_size))).astype(compute_dtype)
    b1_f = b1.astype(jnp.float32)
    b2_f = b2.astype(jnp.float32)
    b3_p = jnp.pad(b3, ((0, 0), (0, out_p - out_size))).astype(jnp.float32)

    grid = (b_p // tb,)
    resident = lambda shape: pl.BlockSpec(shape, lambda i: (0, 0))

    itemsize = jnp.dtype(compute_dtype).itemsize
    flops = 2 * b_p * (d_in_p * h1_dim + h1_dim * h2_dim + h2_dim * out_p)
    bytes_accessed = (
        (x_p.size + w1_p.size + w2_c.size + w3_p.size) * itemsize
        + (b1_f.size + b2_f.size + b3_p.size) * 4
        + b_p * out_p * 4
    )

    out_padded = pl.pallas_call(
        mlp_kernel,
        out_shape=jax.ShapeDtypeStruct((b_p, out_p), jnp.float32),
        grid=grid,
        in_specs=[
            pl.BlockSpec((tb, d_in_p), lambda i: (i, 0)),   # x: tiled over batch
            resident(w1_p.shape), resident(b1_f.shape),      # weights/biases resident
            resident(w2_c.shape), resident(b2_f.shape),
            resident(w3_p.shape), resident(b3_p.shape),
        ],
        out_specs=pl.BlockSpec((tb, out_p), lambda i: (i, 0)),
        compiler_params=pltpu.CompilerParams(
            dimension_semantics=("parallel",),
        ),
        cost_estimate=pl.CostEstimate(
            flops=flops, transcendentals=0, bytes_accessed=bytes_accessed),
    )(x_p, w1_p, b1_f, w2_c, b2_f, w3_p, b3_p)

    return out_padded[:B, :out_size]


def init_params(key, input_size, output_size):
    """Deterministic init mimicking nn.Linear default (uniform +/- 1/sqrt(fan_in))."""
    dims = [(input_size, 128), (128, 64), (64, output_size)]
    params = []
    for i, (fan_in, fan_out) in enumerate(dims):
        kw, kb = jax.random.split(jax.random.fold_in(key, i))
        bound = 1.0 / jnp.sqrt(fan_in)
        w = jax.random.uniform(kw, (fan_in, fan_out), jnp.float32, -bound, bound)
        b = jax.random.uniform(kb, (1, fan_out), jnp.float32, -bound, bound)
        params.extend([w, b])
    return tuple(params)


def reference_forward(x, params):
    w1, b1, w2, b2, w3, b3 = params
    h = jnp.maximum(x @ w1 + b1, 0.0)
    h = jnp.maximum(h @ w2 + b2, 0.0)
    return h @ w3 + b3


if __name__ == "__main__":
    key = jax.random.PRNGKey(0)
    batch, input_size, output_size = 2, 16, 4

    k_x, k_p = jax.random.split(key)
    x = jax.random.normal(k_x, (batch, input_size), jnp.float32)
    params = init_params(k_p, input_size, output_size)
    ref = reference_forward(x, params)

    # f32 path: exact-semantics check vs pure-JAX reference.
    out = jax.block_until_ready(action_classifier_forward(x, params))
    assert out.shape == (batch, output_size)
    assert jnp.allclose(out, ref, atol=1e-5, rtol=1e-5)

    # bf16-fed MXU path (f32 accumulation): halves HBM traffic for x at large B.
    out_bf16 = jax.block_until_ready(
        action_classifier_forward(x, params, compute_dtype=jnp.bfloat16))
    assert out_bf16.shape == (batch, output_size)
    assert jnp.allclose(out_bf16, ref, atol=5e-2, rtol=5e-2)

    print("KERNEL_OK")
</pallas_src>

<mosaic_0001>
module attributes {stable_mosaic.version = 11 : i64} {
  func.func @mlp_kernel(%arg0: i32, %arg1: memref<8x128xf32, #tpu.memory_space<vmem>>, %arg2: memref<128x128xf32, #tpu.memory_space<vmem>>, %arg3: memref<1x128xf32, #tpu.memory_space<vmem>>, %arg4: memref<128x64xf32, #tpu.memory_space<vmem>>, %arg5: memref<1x64xf32, #tpu.memory_space<vmem>>, %arg6: memref<64x128xf32, #tpu.memory_space<vmem>>, %arg7: memref<1x128xf32, #tpu.memory_space<vmem>>, %arg8: memref<8x128xf32, #tpu.memory_space<vmem>>) attributes {dimension_semantics = [#tpu.dimension_semantics<parallel>], iteration_bounds = array<i64: 1>, scalar_prefetch = 0 : i64, scratch_operands = 0 : i64, tpu.core_type = #tpu.core_type<tc>, window_params = [{transform_indices = @transform_0, window_bounds = array<i64: 8, 128>}, {pipeline_mode = #tpu.pipeline_mode<synchronous>, transform_indices = @transform_1, window_bounds = array<i64: 128, 128>}, {pipeline_mode = #tpu.pipeline_mode<synchronous>, transform_indices = @transform_2, window_bounds = array<i64: 1, 128>}, {pipeline_mode = #tpu.pipeline_mode<synchronous>, transform_indices = @transform_3, window_bounds = array<i64: 128, 64>}, {pipeline_mode = #tpu.pipeline_mode<synchronous>, transform_indices = @transform_4, window_bounds = array<i64: 1, 64>}, {pipeline_mode = #tpu.pipeline_mode<synchronous>, transform_indices = @transform_5, window_bounds = array<i64: 64, 128>}, {pipeline_mode = #tpu.pipeline_mode<synchronous>, transform_indices = @transform_6, window_bounds = array<i64: 1, 128>}, {transform_indices = @transform_7, window_bounds = array<i64: 8, 128>}]} {
    %c0 = arith.constant 0 : index
    %c0_0 = arith.constant 0 : index
    %0 = vector.load %arg1[%c0, %c0_0] : memref<8x128xf32, #tpu.memory_space<vmem>>, vector<8x128xf32>
    %c0_1 = arith.constant 0 : index
    %c0_2 = arith.constant 0 : index
    %1 = vector.load %arg2[%c0_1, %c0_2] : memref<128x128xf32, #tpu.memory_space<vmem>>, vector<128x128xf32>
    %cst = arith.constant dense<0.000000e+00> : vector<8x128xf32>
    %2 = tpu.matmul %0, %1, %cst {dimension_numbers = #tpu.dot_dimension_numbers<[1], [0], [0], [1], [0, 0, 1, 1], [], []>} : vector<8x128xf32>, vector<128x128xf32>, vector<8x128xf32> -> vector<8x128xf32>
    %c0_3 = arith.constant 0 : index
    %c0_4 = arith.constant 0 : index
    %3 = vector.load %arg3[%c0_3, %c0_4] : memref<1x128xf32, #tpu.memory_space<vmem>>, vector<1x128xf32>
    %4 = vector.broadcast %3 : vector<1x128xf32> to vector<8x128xf32>
    %5 = arith.addf %2, %4 : vector<8x128xf32>
    %cst_5 = arith.constant 0.000000e+00 : f32
    %6 = vector.broadcast %cst_5 : f32 to vector<8x128xf32>
    %7 = arith.maximumf %5, %6 : vector<8x128xf32>
    %c0_6 = arith.constant 0 : index
    %c0_7 = arith.constant 0 : index
    %8 = vector.load %arg4[%c0_6, %c0_7] : memref<128x64xf32, #tpu.memory_space<vmem>>, vector<128x64xf32>
    %cst_8 = arith.constant dense<0.000000e+00> : vector<8x64xf32>
    %9 = tpu.matmul %7, %8, %cst_8 {dimension_numbers = #tpu.dot_dimension_numbers<[1], [0], [0], [1], [0, 0, 1, 1], [], []>} : vector<8x128xf32>, vector<128x64xf32>, vector<8x64xf32> -> vector<8x64xf32>
    %c0_9 = arith.constant 0 : index
    %c0_10 = arith.constant 0 : index
    %10 = vector.load %arg5[%c0_9, %c0_10] : memref<1x64xf32, #tpu.memory_space<vmem>>, vector<1x64xf32>
    %11 = vector.broadcast %10 : vector<1x64xf32> to vector<8x64xf32>
    %12 = arith.addf %9, %11 : vector<8x64xf32>
    %cst_11 = arith.constant 0.000000e+00 : f32
    %13 = vector.broadcast %cst_11 : f32 to vector<8x64xf32>
    %14 = arith.maximumf %12, %13 : vector<8x64xf32>
    %c0_12 = arith.constant 0 : index
    %c0_13 = arith.constant 0 : index
    %15 = vector.load %arg6[%c0_12, %c0_13] : memref<64x128xf32, #tpu.memory_space<vmem>>, vector<64x128xf32>
    %cst_14 = arith.constant dense<0.000000e+00> : vector<8x128xf32>
    %16 = tpu.matmul %14, %15, %cst_14 {dimension_numbers = #tpu.dot_dimension_numbers<[1], [0], [0], [1], [0, 0, 1, 1], [], []>} : vector<8x64xf32>, vector<64x128xf32>, vector<8x128xf32> -> vector<8x128xf32>
    %c0_15 = arith.constant 0 : index
    %c0_16 = arith.constant 0 : index
    %17 = vector.load %arg7[%c0_15, %c0_16] : memref<1x128xf32, #tpu.memory_space<vmem>>, vector<1x128xf32>
    %18 = vector.broadcast %17 : vector<1x128xf32> to vector<8x128xf32>
    %19 = arith.addf %16, %18 : vector<8x128xf32>
    %c0_17 = arith.constant 0 : index
    %c0_18 = arith.constant 0 : index
    %20 = vector.load %arg8[%c0_17, %c0_18] : memref<8x128xf32, #tpu.memory_space<vmem>>, vector<8x128xf32>
    tpu.vector_store %arg8[%c0_17, %c0_18], %19 {strides = array<i32>} : memref<8x128xf32, #tpu.memory_space<vmem>>, vector<8x128xf32>,
    return
  }
  func.func @transform_0(%arg0: i32) -> (i32, i32) {
    %c0_i32 = arith.constant 0 : i32
    %c0_i32_0 = arith.constant 0 : i32
    return %arg0, %c0_i32 : i32, i32
  }
  func.func @transform_1(%arg0: i32) -> (i32, i32) {
    %c0_i32 = arith.constant 0 : i32
    %c0_i32_0 = arith.constant 0 : i32
    %c0_i32_1 = arith.constant 0 : i32
    return %c0_i32, %c0_i32_0 : i32, i32
  }
  func.func @transform_2(%arg0: i32) -> (i32, i32) {
    %c0_i32 = arith.constant 0 : i32
    %c0_i32_0 = arith.constant 0 : i32
    %c0_i32_1 = arith.constant 0 : i32
    return %c0_i32, %c0_i32_0 : i32, i32
  }
  func.func @transform_3(%arg0: i32) -> (i32, i32) {
    %c0_i32 = arith.constant 0 : i32
    %c0_i32_0 = arith.constant 0 : i32
    %c0_i32_1 = arith.constant 0 : i32
    return %c0_i32, %c0_i32_0 : i32, i32
  }
  func.func @transform_4(%arg0: i32) -> (i32, i32) {
    %c0_i32 = arith.constant 0 : i32
    %c0_i32_0 = arith.constant 0 : i32
    %c0_i32_1 = arith.constant 0 : i32
    return %c0_i32, %c0_i32_0 : i32, i32
  }
  func.func @transform_5(%arg0: i32) -> (i32, i32) {
    %c0_i32 = arith.constant 0 : i32
    %c0_i32_0 = arith.constant 0 : i32
    %c0_i32_1 = arith.constant 0 : i32
    return %c0_i32, %c0_i32_0 : i32, i32
  }
  func.func @transform_6(%arg0: i32) -> (i32, i32) {
    %c0_i32 = arith.constant 0 : i32
    %c0_i32_0 = arith.constant 0 : i32
    %c0_i32_1 = arith.constant 0 : i32
    return %c0_i32, %c0_i32_0 : i32, i32
  }
  func.func @transform_7(%arg0: i32) -> (i32, i32) {
    %c0_i32 = arith.constant 0 : i32
    %c0_i32_0 = arith.constant 0 : i32
    return %arg0, %c0_i32 : i32, i32
  }
}

</mosaic_0001>

<llo_original>
// kernel: action_classifier_forward.1
$region0: #{action_classifier_forward.1}
  #allocation0 [shape = 'u32[]', space=smem, size = 0x4, offset = 0x4, fixed_abs, tag = 'smem constant byte address 0x4 - core index']
  #allocation1 [shape = 'u32[144,128]{1,0:T(1,128)}', space=vmem, size = 0x12000, scoped, tag = 'internal scratch']
  %s0 = inlined_call_operand.vmem [shape: f32[8,128], index: 0, kind: input, shape index: {}]
  %s1 = inlined_call_operand.vmem [shape: f32[128,128], index: 1, kind: input, shape index: {}]
  %s2 = inlined_call_operand.vmem [shape: f32[1,128], index: 2, kind: input, shape index: {}]
  %s3 = inlined_call_operand.vmem [shape: f32[128,64], index: 3, kind: input, shape index: {}]
  %s4 = inlined_call_operand.vmem [shape: f32[1,64], index: 4, kind: input, shape index: {}]
  %s5 = inlined_call_operand.vmem [shape: f32[64,128], index: 5, kind: input, shape index: {}]
  %s6 = inlined_call_operand.vmem [shape: f32[1,128], index: 6, kind: input, shape index: {}]
  %s7 = inlined_call_operand.vmem [shape: f32[8,128], index: 7, kind: output, shape index: {}]
  %s8 = sld [smem:[#allocation0]]
  $region38: #{action_classifier_forward.1} parent=0
    _
  %s10 = ssub.s32 1, %s8
  %s11 = scalar_select 0, %s10, %s8
  // Predicated region
  $region2: #{action_classifier_forward.1} parent=0 // pred_check
    _
  $region3: #{action_classifier_forward.1} parent=0 // pred_check_branch
    %13 = sbr.rel (0) target = $region5
  $region4: #{action_classifier_forward.1} parent=0 // pred_region
    _
  $region5: #{action_classifier_forward.1} parent=0 // pred_fallthru
    _
  // Predicated region
  $region6: #{action_classifier_forward.1} parent=0 // pred_check
    _
  $region7: #{action_classifier_forward.1} parent=0 // pred_check_branch
    %15 = sbr.rel (0) target = $region9
  $region8: #{action_classifier_forward.1} parent=0 // pred_region
    _
  $region9: #{action_classifier_forward.1} parent=0 // pred_fallthru
    _
  // Predicated region
  $region10: #{action_classifier_forward.1} parent=0 // pred_check
    _
  $region11: #{action_classifier_forward.1} parent=0 // pred_check_branch
    %17 = sbr.rel (0) target = $region13
  $region12: #{action_classifier_forward.1} parent=0 // pred_region
    _
  $region13: #{action_classifier_forward.1} parent=0 // pred_fallthru
    _
  // Predicated region
  $region14: #{action_classifier_forward.1} parent=0 // pred_check
    _
  $region15: #{action_classifier_forward.1} parent=0 // pred_check_branch
    %19 = sbr.rel (0) target = $region17
  $region16: #{action_classifier_forward.1} parent=0 // pred_region
    _
  $region17: #{action_classifier_forward.1} parent=0 // pred_fallthru
    _
  // Predicated region
  $region18: #{action_classifier_forward.1} parent=0 // pred_check
    _
  $region19: #{action_classifier_forward.1} parent=0 // pred_check_branch
    %21 = sbr.rel (0) target = $region21
  $region20: #{action_classifier_forward.1} parent=0 // pred_region
    _
  $region21: #{action_classifier_forward.1} parent=0 // pred_fallthru
    _
  // Predicated region
  $region22: #{action_classifier_forward.1} parent=0 // pred_check
    _
  $region23: #{action_classifier_forward.1} parent=0 // pred_check_branch
    %23 = sbr.rel (0) target = $region25
  $region24: #{action_classifier_forward.1} parent=0 // pred_region
    _
  $region25: #{action_classifier_forward.1} parent=0 // pred_fallthru
    _
  // Predicated region
  $region26: #{action_classifier_forward.1} parent=0 // pred_check
    _
  $region27: #{action_classifier_forward.1} parent=0 // pred_check_branch
    %25 = sbr.rel (0) target = $region29
  $region28: #{action_classifier_forward.1} parent=0 // pred_region
    _
  $region29: #{action_classifier_forward.1} parent=0 // pred_fallthru
    _
  %v26 = vld [vmem:[%s0] sm:$0xff]
  %v27 = vld [vmem:[%s1] sm:$0xff]
  %v28 = vld [vmem:[%s1 + $0x8] sm:$0xff]
  %v29 = vld [vmem:[%s1 + $0x10] sm:$0xff]
  %v30 = vld [vmem:[%s1 + $0x18] sm:$0xff]
  %v31 = vld [vmem:[%s1 + $0x20] sm:$0xff]
  %v32 = vld [vmem:[%s1 + $0x28] sm:$0xff]
  %v33 = vld [vmem:[%s1 + $0x30] sm:$0xff]
  %v34 = vld [vmem:[%s1 + $0x38] sm:$0xff]
  %v35 = vld [vmem:[%s1 + $0x40] sm:$0xff]
  %v36 = vld [vmem:[%s1 + $0x48] sm:$0xff]
  %v37 = vld [vmem:[%s1 + $0x50] sm:$0xff]
  %v38 = vld [vmem:[%s1 + $0x58] sm:$0xff]
  %v39 = vld [vmem:[%s1 + $0x60] sm:$0xff]
  %v40 = vld [vmem:[%s1 + $0x68] sm:$0xff]
  %v41 = vld [vmem:[%s1 + $0x70] sm:$0xff]
  %v42 = vld [vmem:[%s1 + $0x78] sm:$0xff]
  %v43 = vld [vmem:[%s2] sm:$0x1]
  %v45 = vlaneseq
  %v46 = vshrl.u32 %v45, 7
  %v47 = vsub.s32 0, %v46
  %v48 = vrot.slane %v43, %v47
  %50 = vmatprep.subr.mxu0 0.0
  %51 = vmatpush1.msra.mxu0 %v27
  %52 = vmatprep.subr.mxu0 0.0
  %53 = vmatpush1.msra.mxu0 %v28
  %54 = vmatprep.subr.mxu0 0.0
  %55 = vmatpush1.msra.mxu0 %v29
  %56 = vmatprep.subr.mxu0 0.0
  %57 = vmatpush1.msra.mxu0 %v30
  %58 = vmatprep.subr.mxu0 0.0
  %59 = vmatpush1.msra.mxu0 %v31
  %60 = vmatprep.subr.mxu0 0.0
  %61 = vmatpush1.msra.mxu0 %v32
  %62 = vmatprep.subr.mxu0 0.0
  %63 = vmatpush1.msra.mxu0 %v33
  %64 = vmatprep.subr.mxu0 0.0
  %65 = vmatpush1.msra.mxu0 %v34
  %66 = vmatprep.subr.mxu0 0.0
  %67 = vmatpush1.msra.mxu0 %v35
  %68 = vmatprep.subr.mxu0 0.0
  %69 = vmatpush1.msra.mxu0 %v36
  %70 = vmatprep.subr.mxu0 0.0
  %71 = vmatpush1.msra.mxu0 %v37
  %72 = vmatprep.subr.mxu0 0.0
  %73 = vmatpush1.msra.mxu0 %v38
  %74 = vmatprep.subr.mxu0 0.0
  %75 = vmatpush1.msra.mxu0 %v39
  %76 = vmatprep.subr.mxu0 0.0
  %77 = vmatpush1.msra.mxu0 %v40
  %78 = vmatprep.subr.mxu0 0.0
  %79 = vmatpush1.msra.mxu0 %v41
  %80 = vmatprep.subr.mxu0 0.0
  %81 = vmatpush1.msra.mxu0 %v42
  %82 = vmatprep.subr.mxu0 0.0
  %83 = vmatpush1.msra.mxu0 0.0
  %84 = vmatprep.subr.mxu0 0.0
  %85 = vmatpush1.msra.mxu0 0.0
  %86 = vmatprep.subr.mxu0 0.0
  %87 = vmatpush1.msra.mxu0 0.0
  %88 = vmatprep.subr.mxu0 0.0
  %89 = vmatpush1.msra.mxu0 0.0
  %90 = vmatprep.subr.mxu0 0.0
  %91 = vmatpush1.msra.mxu0 0.0
  %92 = vmatprep.subr.mxu0 0.0
  %93 = vmatpush1.msra.mxu0 0.0
  %94 = vmatprep.subr.mxu0 0.0
  %95 = vmatpush1.msra.mxu0 0.0
  %96 = vmatprep.subr.mxu0 0.0
  %97 = vmatpush1.msra.mxu0 0.0
  %98 = vmatprep.subr.mxu0 0.0
  %99 = vmatpush1.msra.mxu0 0.0
  %100 = vmatprep.subr.mxu0 0.0
  %101 = vmatpush1.msra.mxu0 0.0
  %102 = vmatprep.subr.mxu0 0.0
  %103 = vmatpush1.msra.mxu0 0.0
  %104 = vmatprep.subr.mxu0 0.0
  %105 = vmatpush1.msra.mxu0 0.0
  %106 = vmatprep.subr.mxu0 0.0
  %107 = vmatpush1.msra.mxu0 0.0
  %108 = vmatprep.subr.mxu0 0.0
  %109 = vmatpush1.msra.mxu0 0.0
  %110 = vmatprep.subr.mxu0 0.0
  %111 = vmatpush1.msra.mxu0 0.0
  %112 = vmatprep.subr.mxu0 0.0
  %113 = vmatpush1.msra.mxu0 0.0
  %114 = vmatprep.mubr.f32.mxu0 0.0
  %115 = vmatmul.mubr.f32.gmra.mrb[0].mxu0 %v26
  %v116 = vpop.f32.mrb[0].mxu0
  %v117 = vadd.f32 %v48, %v116
  %v118 = vpop.f32.mrb[0].mxu0
  %119 = vdwg.mxu0
  %v120 = vmax.f32 %v117, 0.0
  %v121 = vld [vmem:[%s3] sm:$0xff]
  %v122 = vld [vmem:[%s3 + $0x8] sm:$0xff]
  %v123 = vld [vmem:[%s3 + $0x10] sm:$0xff]
  %v124 = vld [vmem:[%s3 + $0x18] sm:$0xff]
  %v125 = vld [vmem:[%s3 + $0x20] sm:$0xff]
  %v126 = vld [vmem:[%s3 + $0x28] sm:$0xff]
  %v127 = vld [vmem:[%s3 + $0x30] sm:$0xff]
  %v128 = vld [vmem:[%s3 + $0x38] sm:$0xff]
  %v129 = vld [vmem:[%s3 + $0x40] sm:$0xff]
  %v130 = vld [vmem:[%s3 + $0x48] sm:$0xff]
  %v131 = vld [vmem:[%s3 + $0x50] sm:$0xff]
  %v132 = vld [vmem:[%s3 + $0x58] sm:$0xff]
  %v133 = vld [vmem:[%s3 + $0x60] sm:$0xff]
  %v134 = vld [vmem:[%s3 + $0x68] sm:$0xff]
  %v135 = vld [vmem:[%s3 + $0x70] sm:$0xff]
  %v136 = vld [vmem:[%s3 + $0x78] sm:$0xff]
  %v137 = vld [vmem:[%s4] sm:$0x1]
  %v139 = vlaneseq
  %v140 = vshrl.u32 %v139, 7
  %v141 = vsub.s32 0, %v140
  %v142 = vrot.slane %v137, %v141
  %144 = vmatprep.subr.mxu0 0.0
  %145 = vmatpush1.msra.mxu0 %v121
  %146 = vmatprep.subr.mxu0 0.0
  %147 = vmatpush1.msra.mxu0 %v122
  %148 = vmatprep.subr.mxu0 0.0
  %149 = vmatpush1.msra.mxu0 %v123
  %150 = vmatprep.subr.mxu0 0.0
  %151 = vmatpush1.msra.mxu0 %v124
  %152 = vmatprep.subr.mxu0 0.0
  %153 = vmatpush1.msra.mxu0 %v125
  %154 = vmatprep.subr.mxu0 0.0
  %155 = vmatpush1.msra.mxu0 %v126
  %156 = vmatprep.subr.mxu0 0.0
  %157 = vmatpush1.msra.mxu0 %v127
  %158 = vmatprep.subr.mxu0 0.0
  %159 = vmatpush1.msra.mxu0 %v128
  %160 = vmatprep.subr.mxu0 0.0
  %161 = vmatpush1.msra.mxu0 %v129
  %162 = vmatprep.subr.mxu0 0.0
  %163 = vmatpush1.msra.mxu0 %v130
  %164 = vmatprep.subr.mxu0 0.0
  %165 = vmatpush1.msra.mxu0 %v131
  %166 = vmatprep.subr.mxu0 0.0
  %167 = vmatpush1.msra.mxu0 %v132
  %168 = vmatprep.subr.mxu0 0.0
  %169 = vmatpush1.msra.mxu0 %v133
  %170 = vmatprep.subr.mxu0 0.0
  %171 = vmatpush1.msra.mxu0 %v134
  %172 = vmatprep.subr.mxu0 0.0
  %173 = vmatpush1.msra.mxu0 %v135
  %174 = vmatprep.subr.mxu0 0.0
  %175 = vmatpush1.msra.mxu0 %v136
  %176 = vmatprep.subr.mxu0 0.0
  %177 = vmatpush1.msra.mxu0 0.0
  %178 = vmatprep.subr.mxu0 0.0
  %179 = vmatpush1.msra.mxu0 0.0
  %180 = vmatprep.subr.mxu0 0.0
  %181 = vmatpush1.msra.mxu0 0.0
  %182 = vmatprep.subr.mxu0 0.0
  %183 = vmatpush1.msra.mxu0 0.0
  %184 = vmatprep.subr.mxu0 0.0
  %185 = vmatpush1.msra.mxu0 0.0
  %186 = vmatprep.subr.mxu0 0.0
  %187 = vmatpush1.msra.mxu0 0.0
  %188 = vmatprep.subr.mxu0 0.0
  %189 = vmatpush1.msra.mxu0 0.0
  %190 = vmatprep.subr.mxu0 0.0
  %191 = vmatpush1.msra.mxu0 0.0
  %192 = vmatprep.subr.mxu0 0.0
  %193 = vmatpush1.msra.mxu0 0.0
  %194 = vmatprep.subr.mxu0 0.0
  %195 = vmatpush1.msra.mxu0 0.0
  %196 = vmatprep.subr.mxu0 0.0
  %197 = vmatpush1.msra.mxu0 0.0
  %198 = vmatprep.subr.mxu0 0.0
  %199 = vmatpush1.msra.mxu0 0.0
  %200 = vmatprep.subr.mxu0 0.0
  %201 = vmatpush1.msra.mxu0 0.0
  %202 = vmatprep.subr.mxu0 0.0
  %203 = vmatpush1.msra.mxu0 0.0
  %204 = vmatprep.subr.mxu0 0.0
  %205 = vmatpush1.msra.mxu0 0.0
  %206 = vmatprep.subr.mxu0 0.0
  %207 = vmatpush1.msra.mxu0 0.0
  %208 = vmatprep.mubr.f32.mxu0 0.0
  %209 = vmatmul.mubr.f32.gmra.mrb[0].mxu0 %v120
  %v210 = vpop.f32.mrb[0].mxu0
  %v211 = vadd.f32 %v142, %v210
  %v212 = vpop.f32.mrb[0].mxu0
  %213 = vdwg.mxu0
  %v214 = vmax.f32 %v211, 0.0
  %v215 = vld [vmem:[%s5] sm:$0xff]
  %v216 = vld [vmem:[%s5 + $0x8] sm:$0xff]
  %v217 = vld [vmem:[%s5 + $0x10] sm:$0xff]
  %v218 = vld [vmem:[%s5 + $0x18] sm:$0xff]
  %v219 = vld [vmem:[%s5 + $0x20] sm:$0xff]
  %v220 = vld [vmem:[%s5 + $0x28] sm:$0xff]
  %v221 = vld [vmem:[%s5 + $0x30] sm:$0xff]
  %v222 = vld [vmem:[%s5 + $0x38] sm:$0xff]
  %v223 = vld [vmem:[%s6] sm:$0x1]
  %v225 = vlaneseq
  %v226 = vshrl.u32 %v225, 7
  %v227 = vsub.s32 0, %v226
  %v228 = vrot.slane %v223, %v227
  %vm230 = vcmask 523264
  %v232 = vsel %vm230, %v214, 0
  %234 = vmatprep.subr.mxu0 0.0
  %235 = vmatpush1.msra.mxu0 %v215
  %236 = vmatprep.subr.mxu0 0.0
  %237 = vmatpush1.msra.mxu0 %v216
  %238 = vmatprep.subr.mxu0 0.0
  %239 = vmatpush1.msra.mxu0 %v217
  %240 = vmatprep.subr.mxu0 0.0
  %241 = vmatpush1.msra.mxu0 %v218
  %242 = vmatprep.subr.mxu0 0.0
  %243 = vmatpush1.msra.mxu0 %v219
  %244 = vmatprep.subr.mxu0 0.0
  %245 = vmatpush1.msra.mxu0 %v220
  %246 = vmatprep.subr.mxu0 0.0
  %247 = vmatpush1.msra.mxu0 %v221
  %248 = vmatprep.subr.mxu0 0.0
  %249 = vmatpush1.msra.mxu0 %v222
  %250 = vmatprep.subr.mxu0 0.0
  %251 = vmatpush1.msra.mxu0 0.0
  %252 = vmatprep.subr.mxu0 0.0
  %253 = vmatpush1.msra.mxu0 0.0
  %254 = vmatprep.subr.mxu0 0.0
  %255 = vmatpush1.msra.mxu0 0.0
  %256 = vmatprep.subr.mxu0 0.0
  %257 = vmatpush1.msra.mxu0 0.0
  %258 = vmatprep.subr.mxu0 0.0
  %259 = vmatpush1.msra.mxu0 0.0
  %260 = vmatprep.subr.mxu0 0.0
  %261 = vmatpush1.msra.mxu0 0.0
  %262 = vmatprep.subr.mxu0 0.0
  %263 = vmatpush1.msra.mxu0 0.0
  %264 = vmatprep.subr.mxu0 0.0
  %265 = vmatpush1.msra.mxu0 0.0
  %266 = vmatprep.subr.mxu0 0.0
  %267 = vmatpush1.msra.mxu0 0.0
  %268 = vmatprep.subr.mxu0 0.0
  %269 = vmatpush1.msra.mxu0 0.0
  %270 = vmatprep.subr.mxu0 0.0
  %271 = vmatpush1.msra.mxu0 0.0
  %272 = vmatprep.subr.mxu0 0.0
  %273 = vmatpush1.msra.mxu0 0.0
  %274 = vmatprep.subr.mxu0 0.0
  %275 = vmatpush1.msra.mxu0 0.0
  %276 = vmatprep.subr.mxu0 0.0
  %277 = vmatpush1.msra.mxu0 0.0
  %278 = vmatprep.subr.mxu0 0.0
  %279 = vmatpush1.msra.mxu0 0.0
  %280 = vmatprep.subr.mxu0 0.0
  %281 = vmatpush1.msra.mxu0 0.0
  %282 = vmatprep.subr.mxu0 0.0
  %283 = vmatpush1.msra.mxu0 0.0
  %284 = vmatprep.subr.mxu0 0.0
  %285 = vmatpush1.msra.mxu0 0.0
  %286 = vmatprep.subr.mxu0 0.0
  %287 = vmatpush1.msra.mxu0 0.0
  %288 = vmatprep.subr.mxu0 0.0
  %289 = vmatpush1.msra.mxu0 0.0
  %290 = vmatprep.subr.mxu0 0.0
  %291 = vmatpush1.msra.mxu0 0.0
  %292 = vmatprep.subr.mxu0 0.0
  %293 = vmatpush1.msra.mxu0 0.0
  %294 = vmatprep.subr.mxu0 0.0
  %295 = vmatpush1.msra.mxu0 0.0
  %296 = vmatprep.subr.mxu0 0.0
  %297 = vmatpush1.msra.mxu0 0.0
  %298 = vmatprep.mubr.f32.mxu0 0.0
  %299 = vmatmul.mubr.f32.gmra.mrb[0].mxu0 %v232
  %v300 = vpop.f32.mrb[0].mxu0
  %v301 = vadd.f32 %v228, %v300
  %v302 = vpop.f32.mrb[0].mxu0
  %303 = vdwg.mxu0
  %304 = vst [vmem:[%s7] sm:$0xff] %v301
  // Predicated region
  $region30: #{action_classifier_forward.1} parent=0 // pred_check
    _
  $region31: #{action_classifier_forward.1} parent=0 // pred_check_branch
    %306 = sbr.rel (0) target = $region33
  $region32: #{action_classifier_forward.1} parent=0 // pred_region
    _
  $region33: #{action_classifier_forward.1} parent=0 // pred_fallthru
    _
  // Predicated region
  $region34: #{action_classifier_forward.1} parent=0 // pred_check
    _
  $region35: #{action_classifier_forward.1} parent=0 // pred_check_branch
    %308 = sbr.rel (0) target = $region37
  $region36: #{action_classifier_forward.1} parent=0 // pred_region
    _
  $region37: #{action_classifier_forward.1} parent=0 // pred_fallthru
    _

</llo_original>
